<compile_context>
chip_gen: v7x
topology: tpu7x:2x2x1
jax: 0.10.0
libtpu: 0.0.40
codegen_flags: <defaults>
</compile_context>

<pallas_src>
import functools

import numpy as np

import jax
import jax.numpy as jnp
from jax import lax
from jax.experimental import pallas as pl
from jax.experimental.pallas import tpu as pltpu


def _round_up(x, m):
    return ((x + m - 1) // m) * m


def _lane_multiple():
    """256 on v6e/v7x (256-wide MXU tiles), 128 on v5e and older generations."""
    try:
        kind = jax.devices()[0].device_kind.lower()
    except Exception:
        return 128
    for old in ("v2", "v3", "v4", "v5"):
        if old in kind:
            return 128
    return 256


def _default_block_rows():
    """Row-tile cap: 1024 amortizes per-step overhead; keep 512 on v7x (64 MiB VMEM)."""
    try:
        kind = jax.devices()[0].device_kind.lower()
    except Exception:
        return 512
    return 512 if "v7" in kind else 1024


def _embedding_encoder_kernel(x_ref, sel_ref, ehi_ref, elo_ref, o_ref, *,
                              cate_cols, cate_offsets, n_pad_cates):
    """One batch-row tile of the encoder.

    x_ref:   (tb, F)   raw features (categorical columns hold integer-valued floats)
    sel_ref: (F, Dp)   0/1 scatter matrix for continuous columns (f32)
    ehi_ref: (Np, Dp)  bf16 high part of the stacked embedding tables
    elo_ref: (Np, Dp)  bf16 low  part (E - f32(E_hi))
    o_ref:   (tb, Dp)  lane-dense (padded) output tile
    """
    x = x_ref[...]                                                      # (tb, F) f32

    # Continuous features: scatter columns to output slots with one small f32 matmul.
    out = jnp.dot(x, sel_ref[...], preferred_element_type=jnp.float32)  # (tb, Dp)

    # Categorical features: boolean one-hot over the concatenated category space.
    # Per-feature index ranges are disjoint by construction, so OR-accumulation is
    # exact; we cast to the matmul dtype exactly once at the end.
    tb = x.shape[0]
    iota = lax.broadcasted_iota(jnp.int32, (tb, n_pad_cates), 1)
    c0, off0 = cate_cols[0], cate_offsets[0]
    # float -> int truncation matches torch .long() for valid (non-negative) indices.
    hot = iota == (x[:, c0:c0 + 1].astype(jnp.int32) + off0)
    for ci, off in zip(cate_cols[1:], cate_offsets[1:]):
        hot = jnp.logical_or(hot, iota == (x[:, ci:ci + 1].astype(jnp.int32) + off))
    onehot = hot.astype(jnp.bfloat16)                                   # exact 0/1

    # Hi/lo split: two bf16 MXU matmuls accumulated in f32 reproduce the f32
    # embedding gather to ~2^-18 relative error (passes 1e-5 checks).
    out = out + jnp.dot(onehot, ehi_ref[...], preferred_element_type=jnp.float32)
    out = out + jnp.dot(onehot, elo_ref[...], preferred_element_type=jnp.float32)
    o_ref[...] = out.astype(o_ref.dtype)


def make_embedding_encoder(embed_tables, *, input_dims, cate_indices, cate_dims,
                           embed_dims, block_rows=None, out_dtype=jnp.float32):
    """Builds a jitted forward for EmbeddingEncoder.

    embed_tables[j] has shape (cate_dims[j], embed_dims[j]) and corresponds to
    feature column cate_indices[j] in the constructor-argument order (the module's
    internal argsort is applied here, exactly as in the PyTorch __init__).
    Returns f(x: (B, input_dims) float) -> (B, output_dims).
    """
    # --- static configuration (mirrors the PyTorch __init__) -------------------
    if cate_indices is None:
        cate_indices = []
    if cate_dims is None:
        cate_dims = []
    if embed_dims is None:
        embed_dims = 1
    if isinstance(cate_indices, int):
        cate_indices = [cate_indices]
    if isinstance(cate_dims, int):
        cate_dims = [cate_dims]
    if cate_indices == [] or cate_dims == []:
        return lambda x: x                          # _is_skip fast path
    if isinstance(embed_dims, int):
        embed_dims = [embed_dims] * len(cate_indices)
    if len(cate_indices) != len(embed_dims):
        raise ValueError("`cate_indices` and `embed_dims` must have same length.")

    order = np.argsort(cate_indices)
    cate_indices = [int(cate_indices[i]) for i in order]
    cate_dims = [int(cate_dims[i]) for i in order]
    embed_dims = [int(embed_dims[i]) for i in order]
    embed_tables = [embed_tables[i] for i in order]

    output_dims = int(input_dims + np.sum(embed_dims) - len(embed_dims))
    F = int(input_dims)

    # Output column offset for every input feature (forward concatenation order).
    is_cate = np.zeros(F, dtype=bool)
    is_cate[np.asarray(cate_indices, dtype=np.int64)] = True
    out_col = np.zeros(F, dtype=np.int64)
    col = 0
    cnt = 0
    for i in range(F):
        out_col[i] = col
        if is_cate[i]:
            col += embed_dims[cnt]
            cnt += 1
        else:
            col += 1
    assert col == output_dims

    lane = _lane_multiple()
    Dp = _round_up(output_dims, 128)
    Np = _round_up(int(np.sum(cate_dims)), 128)
    if lane == 256:                                  # full-width MXU tiles on v6e/v7x
        Dp = _round_up(Dp, 256)
        Np = _round_up(Np, 256)

    # --- precompute S and the hi/lo split of E ONCE (factory time, numpy) -------
    sel_np = np.zeros((F, Dp), dtype=np.float32)
    for i in range(F):
        if not is_cate[i]:
            sel_np[i, out_col[i]] = 1.0
    sel = jnp.asarray(sel_np)

    emb_np = np.zeros((Np, Dp), dtype=np.float32)
    cate_offsets = []
    row = 0
    for j, ci in enumerate(cate_indices):
        cate_offsets.append(row)
        tbl = np.asarray(jax.device_get(embed_tables[j]), dtype=np.float32)
        assert tbl.shape == (cate_dims[j], embed_dims[j])
        emb_np[row:row + cate_dims[j],
               out_col[ci]:out_col[ci] + embed_dims[j]] = tbl
        row += cate_dims[j]
    emb = jnp.asarray(emb_np)
    emb_hi = emb.astype(jnp.bfloat16)
    emb_lo = (emb - emb_hi.astype(jnp.float32)).astype(jnp.bfloat16)

    if block_rows is None:
        block_rows = _default_block_rows()

    kernel = functools.partial(
        _embedding_encoder_kernel,
        cate_cols=tuple(cate_indices),
        cate_offsets=tuple(int(o) for o in cate_offsets),
        n_pad_cates=Np,
    )

    # TODO(synk): for very large vocabularies (Np*Dp*2 beyond a few MiB) replace the
    # one-hot matmul with a DMA/gather of embedding rows (E in HBM, memory_space=pl.ANY)
    # and add an Np-chunked accumulation path so v7x's 64 MiB VMEM is never exceeded.

    def _forward(x):
        B = x.shape[0]
        x = x.astype(jnp.float32)

        # >= 2 row tiles whenever possible so the "parallel" batch axis shards across
        # both TensorCores on v7x; Pallas masks the partial final block, so no jnp.pad.
        if B <= 8:
            tile_b = B
        else:
            tile_b = int(min(block_rows, _round_up(-(-B // 2), 8)))
        n_tiles = pl.cdiv(B, tile_b)

        # Scoped-VMEM budget: S + E_hi/E_lo + double-buffered x/out tiles
        # + onehot/iota intermediates, with 2x headroom.
        vmem_need = (4 * F * Dp + 2 * (2 * Np * Dp)
                     + 2 * 4 * tile_b * F + 2 * 4 * tile_b * Dp
                     + 2 * 4 * tile_b * Np + 4 * tile_b * Dp)
        vmem_limit = int(min(max(2 * vmem_need + (4 << 20), 16 << 20), 64 << 20))

        cost = pl.CostEstimate(
            flops=2 * B * F * Dp + 2 * (2 * B * Np * Dp),
            transcendentals=0,
            bytes_accessed=4 * B * F + 4 * F * Dp + 2 * (2 * Np * Dp) + 4 * B * Dp,
        )

        out_padded = pl.pallas_call(
            kernel,
            out_shape=jax.ShapeDtypeStruct((B, Dp), out_dtype),
            grid_spec=pltpu.PrefetchScalarGridSpec(
                num_scalar_prefetch=0,
                grid=(n_tiles,),
                in_specs=[
                    pl.BlockSpec((tile_b, F), lambda i: (i, 0)),   # x row tile
                    pl.BlockSpec((F, Dp), lambda i: (0, 0)),       # S   (constant -> hoisted)
                    pl.BlockSpec((Np, Dp), lambda i: (0, 0)),      # E_hi (constant -> hoisted)
                    pl.BlockSpec((Np, Dp), lambda i: (0, 0)),      # E_lo (constant -> hoisted)
                ],
                out_specs=pl.BlockSpec((tile_b, Dp), lambda i: (i, 0)),
            ),
            compiler_params=pltpu.CompilerParams(
                dimension_semantics=("parallel",),
                vmem_limit_bytes=vmem_limit,
            ),
            cost_estimate=cost,
        )(x, sel, emb_hi, emb_lo)

        if Dp == output_dims:
            return out_padded
        return out_padded[:, :output_dims]

    return jax.jit(_forward)


def _reference(x, embed_tables, *, input_dims, cate_indices):
    """Pure-JAX reference mirroring the PyTorch forward.

    embed_tables[j] corresponds to feature column cate_indices[j] (constructor order).
    """
    pos = {int(c): j for j, c in enumerate(cate_indices)}
    outs = []
    for i in range(input_dims):
        if i in pos:
            tbl = jnp.asarray(embed_tables[pos[i]], jnp.float32)
            outs.append(jnp.take(tbl, x[:, i].astype(jnp.int32), axis=0))
        else:
            outs.append(x[:, i:i + 1].astype(jnp.float32))
    return jnp.concatenate(outs, axis=1)


if __name__ == "__main__":
    key = jax.random.PRNGKey(0)

    input_dims = 8
    cate_indices = [4, 1, 6]          # deliberately unsorted: module sorts internally
    cate_dims = [7, 5, 3]
    embed_dims = [2, 3, 4]
    n_cat = len(cate_indices)

    keys = jax.random.split(key, 1 + n_cat)

    # nn.Embedding default init: N(0, 1).  Table j matches cate_indices[j].
    embed_tables = [
        jax.random.normal(keys[1 + j], (cd, ed), dtype=jnp.float32)
        for j, (cd, ed) in enumerate(zip(cate_dims, embed_dims))
    ]

    def make_x(subkey, batch):
        x = jax.random.normal(subkey, (batch, input_dims), dtype=jnp.float32)
        for j, (ci, cd) in enumerate(zip(cate_indices, cate_dims)):
            idx = jax.random.randint(jax.random.fold_in(subkey, j), (batch,), 0, cd)
            x = x.at[:, ci].set(idx.astype(jnp.float32))
        return x

    enc = make_embedding_encoder(
        embed_tables, input_dims=input_dims, cate_indices=cate_indices,
        cate_dims=cate_dims, embed_dims=embed_dims)

    expected_dims = input_dims + sum(embed_dims) - len(embed_dims)

    # batch=16 -> two full row tiles (exercises >=2 tiles for v7x megacore);
    # batch=13 -> partial final row block handled by Pallas masking (no jnp.pad).
    for batch in (16, 13):
        x = make_x(jax.random.fold_in(keys[0], batch), batch)
        out = jax.block_until_ready(enc(x))
        ref = _reference(x, embed_tables, input_dims=input_dims,
                         cate_indices=cate_indices)
        assert out.shape == (batch, expected_dims), out.shape
        assert jnp.allclose(out, ref, atol=1e-5, rtol=1e-5), f"mismatch (batch={batch})"

    print("KERNEL_OK")
</pallas_src>

<mosaic_0001>
module attributes {stable_mosaic.version = 11 : i64} {
  func.func @_embedding_encoder_kernel(%arg0: i32, %arg1: memref<8x8xf32, #tpu.memory_space<vmem>>, %arg2: memref<8x256xf32, #tpu.memory_space<vmem>>, %arg3: memref<256x256xbf16, #tpu.memory_space<vmem>>, %arg4: memref<256x256xbf16, #tpu.memory_space<vmem>>, %arg5: memref<8x256xf32, #tpu.memory_space<vmem>>) attributes {dimension_semantics = [#tpu.dimension_semantics<parallel>], iteration_bounds = array<i64: 2>, scalar_prefetch = 0 : i64, scratch_operands = 0 : i64, tpu.core_type = #tpu.core_type<tc>, window_params = [{transform_indices = @transform_0, window_bounds = array<i64: 8, 8>}, {pipeline_mode = #tpu.pipeline_mode<synchronous>, transform_indices = @transform_1, window_bounds = array<i64: 8, 256>}, {pipeline_mode = #tpu.pipeline_mode<synchronous>, transform_indices = @transform_2, window_bounds = array<i64: 256, 256>}, {pipeline_mode = #tpu.pipeline_mode<synchronous>, transform_indices = @transform_3, window_bounds = array<i64: 256, 256>}, {transform_indices = @transform_4, window_bounds = array<i64: 8, 256>}]} {
    %c0 = arith.constant 0 : index
    %c0_0 = arith.constant 0 : index
    %0 = vector.load %arg1[%c0, %c0_0] : memref<8x8xf32, #tpu.memory_space<vmem>>, vector<8x8xf32>
    %c0_1 = arith.constant 0 : index
    %c0_2 = arith.constant 0 : index
    %1 = vector.load %arg2[%c0_1, %c0_2] : memref<8x256xf32, #tpu.memory_space<vmem>>, vector<8x256xf32>
    %cst = arith.constant dense<0.000000e+00> : vector<8x256xf32>
    %2 = tpu.matmul %0, %1, %cst {dimension_numbers = #tpu.dot_dimension_numbers<[1], [0], [0], [1], [0, 0, 1, 1], [], []>} : vector<8x8xf32>, vector<8x256xf32>, vector<8x256xf32> -> vector<8x256xf32>
    %3 = tpu.iota {dimensions = array<i32: 1>} : vector<8x256xi32>
    %4 = vector.extract_strided_slice %0 {offsets = [0, 1], sizes = [8, 1], strides = [1, 1]} : vector<8x8xf32> to vector<8x1xf32>
    %5 = arith.fptosi %4 : vector<8x1xf32> to vector<8x1xi32>
    %c0_i32 = arith.constant 0 : i32
    %6 = vector.broadcast %c0_i32 : i32 to vector<8x1xi32>
    %7 = arith.addi %5, %6 : vector<8x1xi32>
    %8 = vector.broadcast %7 : vector<8x1xi32> to vector<8x256xi32>
    %9 = arith.cmpi eq, %3, %8 : vector<8x256xi32>
    %10 = vector.extract_strided_slice %0 {offsets = [0, 4], sizes = [8, 1], strides = [1, 1]} : vector<8x8xf32> to vector<8x1xf32>
    %11 = arith.fptosi %10 : vector<8x1xf32> to vector<8x1xi32>
    %c5_i32 = arith.constant 5 : i32
    %12 = vector.broadcast %c5_i32 : i32 to vector<8x1xi32>
    %13 = arith.addi %11, %12 : vector<8x1xi32>
    %14 = vector.broadcast %13 : vector<8x1xi32> to vector<8x256xi32>
    %15 = arith.cmpi eq, %3, %14 : vector<8x256xi32>
    %16 = arith.ori %9, %15 : vector<8x256xi1>
    %17 = vector.extract_strided_slice %0 {offsets = [0, 6], sizes = [8, 1], strides = [1, 1]} : vector<8x8xf32> to vector<8x1xf32>
    %18 = arith.fptosi %17 : vector<8x1xf32> to vector<8x1xi32>
    %c12_i32 = arith.constant 12 : i32
    %19 = vector.broadcast %c12_i32 : i32 to vector<8x1xi32>
    %20 = arith.addi %18, %19 : vector<8x1xi32>
    %21 = vector.broadcast %20 : vector<8x1xi32> to vector<8x256xi32>
    %22 = arith.cmpi eq, %3, %21 : vector<8x256xi32>
    %23 = arith.ori %16, %22 : vector<8x256xi1>
    %24 = arith.extui %23 : vector<8x256xi1> to vector<8x256xi32>
    %25 = arith.sitofp %24 : vector<8x256xi32> to vector<8x256xf32>
    %26 = arith.truncf %25 : vector<8x256xf32> to vector<8x256xbf16>
    %c0_3 = arith.constant 0 : index
    %c0_4 = arith.constant 0 : index
    %27 = vector.load %arg3[%c0_3, %c0_4] : memref<256x256xbf16, #tpu.memory_space<vmem>>, vector<256x256xbf16>
    %cst_5 = arith.constant dense<0.000000e+00> : vector<8x256xf32>
    %28 = tpu.matmul %26, %27, %cst_5 {dimension_numbers = #tpu.dot_dimension_numbers<[1], [0], [0], [1], [0, 0, 1, 1], [], []>} : vector<8x256xbf16>, vector<256x256xbf16>, vector<8x256xf32> -> vector<8x256xf32>
    %29 = arith.addf %2, %28 : vector<8x256xf32>
    %c0_6 = arith.constant 0 : index
    %c0_7 = arith.constant 0 : index
    %30 = vector.load %arg4[%c0_6, %c0_7] : memref<256x256xbf16, #tpu.memory_space<vmem>>, vector<256x256xbf16>
    %cst_8 = arith.constant dense<0.000000e+00> : vector<8x256xf32>
    %31 = tpu.matmul %26, %30, %cst_8 {dimension_numbers = #tpu.dot_dimension_numbers<[1], [0], [0], [1], [0, 0, 1, 1], [], []>} : vector<8x256xbf16>, vector<256x256xbf16>, vector<8x256xf32> -> vector<8x256xf32>
    %32 = arith.addf %29, %31 : vector<8x256xf32>
    %c0_9 = arith.constant 0 : index
    %c0_10 = arith.constant 0 : index
    %33 = vector.load %arg5[%c0_9, %c0_10] : memref<8x256xf32, #tpu.memory_space<vmem>>, vector<8x256xf32>
    tpu.vector_store %arg5[%c0_9, %c0_10], %32 {strides = array<i32>} : memref<8x256xf32, #tpu.memory_space<vmem>>, vector<8x256xf32>,
    return
  }
  func.func @transform_0(%arg0: i32) -> (i32, i32) {
    %c0_i32 = arith.constant 0 : i32
    %c0_i32_0 = arith.constant 0 : i32
    return %arg0, %c0_i32 : i32, i32
  }
  func.func @transform_1(%arg0: i32) -> (i32, i32) {
    %c0_i32 = arith.constant 0 : i32
    %c0_i32_0 = arith.constant 0 : i32
    %c0_i32_1 = arith.constant 0 : i32
    return %c0_i32, %c0_i32_0 : i32, i32
  }
  func.func @transform_2(%arg0: i32) -> (i32, i32) {
    %c0_i32 = arith.constant 0 : i32
    %c0_i32_0 = arith.constant 0 : i32
    %c0_i32_1 = arith.constant 0 : i32
    return %c0_i32, %c0_i32_0 : i32, i32
  }
  func.func @transform_3(%arg0: i32) -> (i32, i32) {
    %c0_i32 = arith.constant 0 : i32
    %c0_i32_0 = arith.constant 0 : i32
    %c0_i32_1 = arith.constant 0 : i32
    return %c0_i32, %c0_i32_0 : i32, i32
  }
  func.func @transform_4(%arg0: i32) -> (i32, i32) {
    %c0_i32 = arith.constant 0 : i32
    %c0_i32_0 = arith.constant 0 : i32
    return %arg0, %c0_i32 : i32, i32
  }
}

</mosaic_0001>

<llo_original>
// kernel: _forward.1
$region0: #{_forward.1}
  #allocation0 [shape = 'u32[]', space=smem, size = 0x4, offset = 0x4, fixed_abs, tag = 'smem constant byte address 0x4 - core index']
  #allocation1 [shape = 'u32[144,128]{1,0:T(1,128)}', space=vmem, size = 0x12000, scoped, tag = 'internal scratch']
  %s0 = inlined_call_operand.vmem [shape: f32[16,8], index: 0, kind: input, shape index: {}]
  %s1 = inlined_call_operand.vmem [shape: f32[8,256], index: 1, kind: input, shape index: {}]
  %s2 = inlined_call_operand.vmem [shape: bf16[256,256], index: 2, kind: input, shape index: {}]
  %s3 = inlined_call_operand.vmem [shape: bf16[256,256], index: 3, kind: input, shape index: {}]
  %s4 = inlined_call_operand.vmem [shape: f32[16,256], index: 4, kind: output, shape index: {}]
  %s5 = sld [smem:[#allocation0]]
  $region49: #{_forward.1} parent=0
    _
  %s7 = ssub.s32 1, %s5
  %s8 = scalar_select 0, %s7, %s5
  loop: start=0, step=1, limit=4
  $region2: #{_forward.1} parent=0 // loop_pre_header
    _
  $region3: #{_forward.1} parent=0 // loop_header
    %s10 = sphi 0, %s14
    %p11 = scmp.ge.s32.totalorder %s10, 4
    %s20 = sphi 0, %s22
    %s23 = sphi 0, %s20
    %s24 = sphi 0, %s23
    %s40 = sphi 0, %s24
    %s44 = sphi 0, %s44
    %s46 = sphi 0, %s44
    %s47 = sphi 0, %s46
    %s61 = sphi 0, %s47
    %s65 = sphi 0, %s65
    %s67 = sphi 0, %s65
    %s68 = sphi 0, %s67
    %s82 = sphi 0, %s68
    %s86 = sphi 0, %s86
    %s88 = sphi 0, %s86
    %s89 = sphi 0, %s88
    %s103 = sphi 0, %s89
    %s109 = sphi 0, %s111
    %s112 = sphi 0, %s109
    %s113 = sphi 0, %s112
    %s129 = sphi 0, %s113
  $region4: #{_forward.1} parent=0 // loop_header_branch
    %13 = sbr.rel (%p11) target = $region8
  $region5: #{_forward.1} parent=0 // loop_body
    %s15 = ssub.s32 %s10, 1
    %s16 = ssub.s32 %s10, 2
    %s17 = sadd.s32 %s10, 1
    %s18 = ssub.s32 %s10, %s17
    %p19 = scmp.eq.s32.totalorder %s18, 0
    %s21 = sadd.s32 %s20, 1
    %s22 = scalar_select %p19, %s20, %s21
    %p25 = pneg %p19
    %p26 = scmp.eq.s32.totalorder %s10, 1
    %p27 = por %p25, %p26
    %p28 = scmp.ne.s32.totalorder %s20, %s23
    %p29 = scmp.eq.s32.totalorder %s10, 0
    %p30 = por %p28, %p29
    %p31 = scmp.ne.s32.totalorder %s20, %s23
    %p32 = scmp.eq.s32.totalorder %s15, 1
    %p33 = por %p31, %p32
    %p34 = scmp.ne.s32.totalorder %s23, %s24
    %p35 = scmp.eq.s32.totalorder %s15, 0
    %p36 = por %p34, %p35
    %p37 = scmp.ne.s32.totalorder %s23, %s24
    %p38 = scmp.eq.s32.totalorder %s16, 1
    %p39 = por %p37, %p38
    %p41 = scmp.ne.s32.totalorder %s24, %s40
    %p42 = scmp.eq.s32.totalorder %s16, 0
    %p43 = por %p41, %p42
    %s45 = sadd.s32 %s44, 1
    %p48 = scmp.eq.s32.totalorder %s10, 1
    %p49 = scmp.ne.s32.totalorder %s44, %s46
    %p50 = scmp.eq.s32.totalorder %s10, 0
    %p51 = por %p49, %p50
    %p52 = scmp.ne.s32.totalorder %s44, %s46
    %p53 = scmp.eq.s32.totalorder %s15, 1
    %p54 = por %p52, %p53
    %p55 = scmp.ne.s32.totalorder %s46, %s47
    %p56 = scmp.eq.s32.totalorder %s15, 0
    %p57 = por %p55, %p56
    %p58 = scmp.ne.s32.totalorder %s46, %s47
    %p59 = scmp.eq.s32.totalorder %s16, 1
    %p60 = por %p58, %p59
    %p62 = scmp.ne.s32.totalorder %s47, %s61
    %p63 = scmp.eq.s32.totalorder %s16, 0
    %p64 = por %p62, %p63
    %s66 = sadd.s32 %s65, 1
    %p69 = scmp.eq.s32.totalorder %s10, 1
    %p70 = scmp.ne.s32.totalorder %s65, %s67
    %p71 = scmp.eq.s32.totalorder %s10, 0
    %p72 = por %p70, %p71
    %p73 = scmp.ne.s32.totalorder %s65, %s67
    %p74 = scmp.eq.s32.totalorder %s15, 1
    %p75 = por %p73, %p74
    %p76 = scmp.ne.s32.totalorder %s67, %s68
    %p77 = scmp.eq.s32.totalorder %s15, 0
    %p78 = por %p76, %p77
    %p79 = scmp.ne.s32.totalorder %s67, %s68
    %p80 = scmp.eq.s32.totalorder %s16, 1
    %p81 = por %p79, %p80
    %p83 = scmp.ne.s32.totalorder %s68, %s82
    %p84 = scmp.eq.s32.totalorder %s16, 0
    %p85 = por %p83, %p84
    %s87 = sadd.s32 %s86, 1
    %p90 = scmp.eq.s32.totalorder %s10, 1
    %p91 = scmp.ne.s32.totalorder %s86, %s88
    %p92 = scmp.eq.s32.totalorder %s10, 0
    %p93 = por %p91, %p92
    %p94 = scmp.ne.s32.totalorder %s86, %s88
    %p95 = scmp.eq.s32.totalorder %s15, 1
    %p96 = por %p94, %p95
    %p97 = scmp.ne.s32.totalorder %s88, %s89
    %p98 = scmp.eq.s32.totalorder %s15, 0
    %p99 = por %p97, %p98
    %p100 = scmp.ne.s32.totalorder %s88, %s89
    %p101 = scmp.eq.s32.totalorder %s16, 1
    %p102 = por %p100, %p101
    %p104 = scmp.ne.s32.totalorder %s89, %s103
    %p105 = scmp.eq.s32.totalorder %s16, 0
    %p106 = por %p104, %p105
    %s107 = ssub.s32 %s10, %s17
    %p108 = scmp.eq.s32.totalorder %s107, 0
    %s110 = sadd.s32 %s109, 1
    %s111 = scalar_select %p108, %s109, %s110
    %p114 = pneg %p108
    %p115 = scmp.eq.s32.totalorder %s10, 1
    %p116 = por %p114, %p115
    %p117 = scmp.ne.s32.totalorder %s109, %s112
    %p118 = scmp.eq.s32.totalorder %s10, 0
    %p119 = por %p117, %p118
    %p120 = scmp.ne.s32.totalorder %s109, %s112
    %p121 = scmp.eq.s32.totalorder %s15, 1
    %p122 = por %p120, %p121
    %p123 = scmp.ne.s32.totalorder %s112, %s113
    %p124 = scmp.eq.s32.totalorder %s15, 0
    %p125 = por %p123, %p124
    %p126 = scmp.ne.s32.totalorder %s112, %s113
    %p127 = scmp.eq.s32.totalorder %s16, 1
    %p128 = por %p126, %p127
    %p130 = scmp.ne.s32.totalorder %s113, %s129
    %p131 = scmp.eq.s32.totalorder %s16, 0
    %p132 = por %p130, %p131
    %p133 = scmp.le.s32.totalorder 1, %s10
    %p134 = scmp.lt.s32.totalorder %s10, 3
    %p135 = pnand %p133, %p134
    %p136 = pneg %p135
    // Predicated region
    $region9: #{_forward.1} parent=5 // pred_check
      _
    $region10: #{_forward.1} parent=5 // pred_check_branch
      %138 = sbr.rel (%p135) target = $region12
    $region11: #{_forward.1} parent=5 // pred_region
      %s139 = ssub.s32 %s10, 1
      // Predicated region
      $region13: #{_forward.1} parent=11 // pred_check
        %p140 = pneg %p57
      $region14: #{_forward.1} parent=11 // pred_check_branch
        %142 = sbr.rel (%p140) target = $region16
      $region15: #{_forward.1} parent=11 // pred_region
        _
      $region16: #{_forward.1} parent=11 // pred_fallthru
        _
      // Predicated region
      $region17: #{_forward.1} parent=11 // pred_check
        %p143 = pneg %p78
      $region18: #{_forward.1} parent=11 // pred_check_branch
        %145 = sbr.rel (%p143) target = $region20
      $region19: #{_forward.1} parent=11 // pred_region
        _
      $region20: #{_forward.1} parent=11 // pred_fallthru
        _
      // Predicated region
      $region21: #{_forward.1} parent=11 // pred_check
        %p146 = pneg %p99
      $region22: #{_forward.1} parent=11 // pred_check_branch
        %148 = sbr.rel (%p146) target = $region24
      $region23: #{_forward.1} parent=11 // pred_region
        _
      $region24: #{_forward.1} parent=11 // pred_fallthru
        _
    $region12: #{_forward.1} parent=5 // pred_fallthru
      _
    %p149 = scmp.lt.s32.totalorder %s10, 2
    // Predicated region
    $region25: #{_forward.1} parent=5 // pred_check
      %p150 = pneg %p149
    $region26: #{_forward.1} parent=5 // pred_check_branch
      %152 = sbr.rel (%p150) target = $region28
    $region27: #{_forward.1} parent=5 // pred_region
      // Predicated region
      $region29: #{_forward.1} parent=27 // pred_check
        %p153 = pneg %p30
      $region30: #{_forward.1} parent=27 // pred_check_branch
        %155 = sbr.rel (%p153) target = $region32
      $region31: #{_forward.1} parent=27 // pred_region
        %p156 = scmp.lt.s32.totalorder %s10, 1
        %s157 = scalar_select %p156, %s10, 1
        %s158 = smul.addr %s157, 8
        %s159 = scalar_lea.vmem %s0, %s158
      $region32: #{_forward.1} parent=27 // pred_fallthru
        _
    $region28: #{_forward.1} parent=5 // pred_fallthru
      _
    %p160 = scmp.le.s32.totalorder 1, %s10
    %p161 = scmp.lt.s32.totalorder %s10, 3
    %p162 = pnand %p160, %p161
    %p163 = pneg %p162
    // Predicated region
    $region33: #{_forward.1} parent=5 // pred_check
      _
    $region34: #{_forward.1} parent=5 // pred_check_branch
      %165 = sbr.rel (%p162) target = $region36
    $region35: #{_forward.1} parent=5 // pred_region
      %s166 = ssub.s32 %s10, 1
      %p167 = scmp.lt.s32.totalorder %s15, 1
      %s168 = scalar_select %p167, %s15, 1
      %s169 = smul.addr %s168, 8
      %s170 = scalar_lea.vmem %s0, %s169
      %p171 = pneg %p36
      %p172 = pneg %p33
      %p173 = pneg %p57
      %p174 = pneg %p54
      %p175 = pneg %p78
      %p176 = pneg %p75
      %p177 = pneg %p99
      %p178 = pneg %p96
      %p179 = pneg %p125
      %p180 = pneg %p122
      %p181 = scmp.lt.s32.totalorder %s15, 1
      %s182 = scalar_select %p181, %s15, 1
      %s183 = smul.addr %s182, 2
      %s184 = smul.addr %s183, 8
      %s185 = scalar_lea.vmem %s4, %s184
      %p186 = scmp.lt.s32.totalorder %s15, 1
      %s187 = scalar_select %p186, %s15, 1
      %s188 = smul.addr %s187, 8
      %s189 = scalar_lea.vmem %s0, %s188
      %p190 = scmp.lt.s32.totalorder %s15, 1
      %s191 = scalar_select %p190, %s15, 1
      %s192 = smul.addr %s191, 2
      %s193 = smul.addr %s192, 8
      %s194 = scalar_lea.vmem %s4, %s193
      %v195 = vld [vmem:[%s189] sm:$0xff]
      %v196 = vld [vmem:[%s1] sm:$0xff]
      %v197 = vld [vmem:[%s1 + $0x8] sm:$0xff]
      %v198 = vlaneseq
      %v199 = vand.u32 %v198, 127
      %v200 = vadd.s32 %v199, 128
      %v201 = vcvt.f32.s32.to.zero.pseudo %v195
      %202 = vset.pattern.permute.xlu0 1
      %203 = vperm.xlu0 %202, %v201
      %v204 = vpop.permute.xlu0 %203
      %vm205 = vcmp.eq.s32.totalorder %v199, %v204
      %vm206 = vcmp.eq.s32.totalorder %v200, %v204
      %v207 = vadd.s32 %v201, 5
      %208 = vset.pattern.permute.xlu0 4
      %209 = vperm.xlu0 %208, %v207
      %v210 = vpop.permute.xlu0 %209
      %vm211 = vcmp.eq.s32.totalorder %v199, %v210
      %vm212 = vcmp.eq.s32.totalorder %v200, %v210
      %vm213 = vmor %vm205, %vm211
      %vm214 = vmor %vm206, %vm212
      %v215 = vadd.s32 %v201, 12
      %216 = vset.pattern.permute.xlu0 6
      %217 = vperm.xlu0 %216, %v215
      %v218 = vpop.permute.xlu0 %217
      %vm219 = vcmp.eq.s32.totalorder %v199, %v218
      %vm220 = vcmp.eq.s32.totalorder %v200, %v218
      %vm221 = vmor %vm213, %vm219
      %vm222 = vmor %vm214, %vm220
      %v223 = vsel %vm221, 1, 0
      %v224 = vsel %vm222, 1, 0
      %v225 = vcvt.s32.f32 %v223
      %v226 = vcvt.s32.f32 %v224
      %v227 = vpack.c.bf16 %v225, %v225
      %v228 = vpack.c.bf16 %v226, %v226
      %v229 = vld [vmem:[%s2] sm:$0xff]
      %v230 = vld [vmem:[%s2 + $0x8] sm:$0xff]
      %v231 = vld [vmem:[%s2 + $0x10] sm:$0xff]
      %v232 = vld [vmem:[%s2 + $0x18] sm:$0xff]
      %v233 = vld [vmem:[%s2 + $0x20] sm:$0xff]
      %v234 = vld [vmem:[%s2 + $0x28] sm:$0xff]
      %v235 = vld [vmem:[%s2 + $0x30] sm:$0xff]
      %v236 = vld [vmem:[%s2 + $0x38] sm:$0xff]
      %v237 = vld [vmem:[%s2 + $0x40] sm:$0xff]
      %v238 = vld [vmem:[%s2 + $0x48] sm:$0xff]
      %v239 = vld [vmem:[%s2 + $0x50] sm:$0xff]
      %v240 = vld [vmem:[%s2 + $0x58] sm:$0xff]
      %v241 = vld [vmem:[%s2 + $0x60] sm:$0xff]
      %v242 = vld [vmem:[%s2 + $0x68] sm:$0xff]
      %v243 = vld [vmem:[%s2 + $0x70] sm:$0xff]
      %v244 = vld [vmem:[%s2 + $0x78] sm:$0xff]
      %v245 = vld [vmem:[%s2 + $0x80] sm:$0xff]
      %v246 = vld [vmem:[%s2 + $0x88] sm:$0xff]
      %v247 = vld [vmem:[%s2 + $0x90] sm:$0xff]
      %v248 = vld [vmem:[%s2 + $0x98] sm:$0xff]
      %v249 = vld [vmem:[%s2 + $0xa0] sm:$0xff]
      %v250 = vld [vmem:[%s2 + $0xa8] sm:$0xff]
      %v251 = vld [vmem:[%s2 + $0xb0] sm:$0xff]
      %v252 = vld [vmem:[%s2 + $0xb8] sm:$0xff]
      %v253 = vld [vmem:[%s2 + $0xc0] sm:$0xff]
      %v254 = vld [vmem:[%s2 + $0xc8] sm:$0xff]
      %v255 = vld [vmem:[%s2 + $0xd0] sm:$0xff]
      %v256 = vld [vmem:[%s2 + $0xd8] sm:$0xff]
      %v257 = vld [vmem:[%s2 + $0xe0] sm:$0xff]
      %v258 = vld [vmem:[%s2 + $0xe8] sm:$0xff]
      %v259 = vld [vmem:[%s2 + $0xf0] sm:$0xff]
      %v260 = vld [vmem:[%s2 + $0xf8] sm:$0xff]
      %v293 = vunpack.c.l.b16 %v229
      %v294 = vunpack.c.h.b16 %v229
      %v295 = vunpack.c.l.b16 %v230
      %v296 = vunpack.c.h.b16 %v230
      %v297 = vunpack.c.l.b16 %v231
      %v298 = vunpack.c.h.b16 %v231
      %v299 = vunpack.c.l.b16 %v232
      %v300 = vunpack.c.h.b16 %v232
      %v301 = vunpack.c.l.b16 %v233
      %v302 = vunpack.c.h.b16 %v233
      %v303 = vunpack.c.l.b16 %v234
      %v304 = vunpack.c.h.b16 %v234
      %v305 = vunpack.c.l.b16 %v235
      %v306 = vunpack.c.h.b16 %v235
      %v307 = vunpack.c.l.b16 %v236
      %v308 = vunpack.c.h.b16 %v236
      %v309 = vunpack.c.l.b16 %v237
      %v310 = vunpack.c.h.b16 %v237
      %v311 = vunpack.c.l.b16 %v238
      %v312 = vunpack.c.h.b16 %v238
      %v313 = vunpack.c.l.b16 %v239
      %v314 = vunpack.c.h.b16 %v239
      %v315 = vunpack.c.l.b16 %v240
      %v316 = vunpack.c.h.b16 %v240
      %v317 = vunpack.c.l.b16 %v241
      %v318 = vunpack.c.h.b16 %v241
      %v319 = vunpack.c.l.b16 %v242
      %v320 = vunpack.c.h.b16 %v242
      %v321 = vunpack.c.l.b16 %v243
      %v322 = vunpack.c.h.b16 %v243
      %v323 = vunpack.c.l.b16 %v244
      %v324 = vunpack.c.h.b16 %v244
      %v325 = vunpack.c.l.b16 %v245
      %v326 = vunpack.c.h.b16 %v245
      %v327 = vunpack.c.l.b16 %v246
      %v328 = vunpack.c.h.b16 %v246
      %v329 = vunpack.c.l.b16 %v247
      %v330 = vunpack.c.h.b16 %v247
      %v331 = vunpack.c.l.b16 %v248
      %v332 = vunpack.c.h.b16 %v248
      %v333 = vunpack.c.l.b16 %v249
      %v334 = vunpack.c.h.b16 %v249
      %v335 = vunpack.c.l.b16 %v250
      %v336 = vunpack.c.h.b16 %v250
      %v337 = vunpack.c.l.b16 %v251
      %v338 = vunpack.c.h.b16 %v251
      %v339 = vunpack.c.l.b16 %v252
      %v340 = vunpack.c.h.b16 %v252
      %v341 = vunpack.c.l.b16 %v253
      %v342 = vunpack.c.h.b16 %v253
      %v343 = vunpack.c.l.b16 %v254
      %v344 = vunpack.c.h.b16 %v254
      %v345 = vunpack.c.l.b16 %v255
      %v346 = vunpack.c.h.b16 %v255
      %v347 = vunpack.c.l.b16 %v256
      %v348 = vunpack.c.h.b16 %v256
      %v349 = vunpack.c.l.b16 %v257
      %v350 = vunpack.c.h.b16 %v257
      %v351 = vunpack.c.l.b16 %v258
      %v352 = vunpack.c.h.b16 %v258
      %v353 = vunpack.c.l.b16 %v259
      %v354 = vunpack.c.h.b16 %v259
      %v355 = vunpack.c.l.b16 %v260
      %v356 = vunpack.c.h.b16 %v260
      %v357 = vpack.c.b16 %v295, %v293
      %v358 = vpack.c.b16 %v296, %v294
      %v359 = vpack.c.b16 %v299, %v297
      %v360 = vpack.c.b16 %v300, %v298
      %v361 = vpack.c.b16 %v303, %v301
      %v362 = vpack.c.b16 %v304, %v302
      %v363 = vpack.c.b16 %v307, %v305
      %v364 = vpack.c.b16 %v308, %v306
      %v365 = vpack.c.b16 %v311, %v309
      %v366 = vpack.c.b16 %v312, %v310
      %v367 = vpack.c.b16 %v315, %v313
      %v368 = vpack.c.b16 %v316, %v314
      %v369 = vpack.c.b16 %v319, %v317
      %v370 = vpack.c.b16 %v320, %v318
      %v371 = vpack.c.b16 %v323, %v321
      %v372 = vpack.c.b16 %v324, %v322
      %v373 = vpack.c.b16 %v327, %v325
      %v374 = vpack.c.b16 %v328, %v326
      %v375 = vpack.c.b16 %v331, %v329
      %v376 = vpack.c.b16 %v332, %v330
      %v377 = vpack.c.b16 %v335, %v333
      %v378 = vpack.c.b16 %v336, %v334
      %v379 = vpack.c.b16 %v339, %v337
      %v380 = vpack.c.b16 %v340, %v338
      %v381 = vpack.c.b16 %v343, %v341
      %v382 = vpack.c.b16 %v344, %v342
      %v383 = vpack.c.b16 %v347, %v345
      %v384 = vpack.c.b16 %v348, %v346
      %v385 = vpack.c.b16 %v351, %v349
      %v386 = vpack.c.b16 %v352, %v350
      %v387 = vpack.c.b16 %v355, %v353
      %v388 = vpack.c.b16 %v356, %v354
      %421 = vmatprep.subr.bf16.mxu0 %v358
      %422 = vmatpush1.bf16.msra.mxu0 %v357
      %423 = vmatprep.subr.bf16.mxu0 %v360
      %424 = vmatpush1.bf16.msra.mxu0 %v359
      %425 = vmatprep.subr.bf16.mxu0 %v362
      %426 = vmatpush1.bf16.msra.mxu0 %v361
      %427 = vmatprep.subr.bf16.mxu0 %v364
      %428 = vmatpush1.bf16.msra.mxu0 %v363
      %429 = vmatprep.subr.bf16.mxu0 %v366
      %430 = vmatpush1.bf16.msra.mxu0 %v365
      %431 = vmatprep.subr.bf16.mxu0 %v368
      %432 = vmatpush1.bf16.msra.mxu0 %v367
      %433 = vmatprep.subr.bf16.mxu0 %v370
      %434 = vmatpush1.bf16.msra.mxu0 %v369
      %435 = vmatprep.subr.bf16.mxu0 %v372
      %436 = vmatpush1.bf16.msra.mxu0 %v371
      %437 = vmatprep.subr.bf16.mxu0 %v374
      %438 = vmatpush1.bf16.msra.mxu0 %v373
      %439 = vmatprep.subr.bf16.mxu0 %v376
      %440 = vmatpush1.bf16.msra.mxu0 %v375
      %441 = vmatprep.subr.bf16.mxu0 %v378
      %442 = vmatpush1.bf16.msra.mxu0 %v377
      %443 = vmatprep.subr.bf16.mxu0 %v380
      %444 = vmatpush1.bf16.msra.mxu0 %v379
      %445 = vmatprep.subr.bf16.mxu0 %v382
      %446 = vmatpush1.bf16.msra.mxu0 %v381
      %447 = vmatprep.subr.bf16.mxu0 %v384
      %448 = vmatpush1.bf16.msra.mxu0 %v383
      %449 = vmatprep.subr.bf16.mxu0 %v386
      %450 = vmatpush1.bf16.msra.mxu0 %v385
      %451 = vmatprep.subr.bf16.mxu0 %v388
      %452 = vmatpush1.bf16.msra.mxu0 %v387
      %453 = vmatprep.mubr.bf16.mxu0 %v228
      %454 = vmatmul.mubr.bf16.gmra.mrb[0].mxu0 %v227
      %v455 = vpop.f32.mrb[0].mxu0
      %v456 = vadd.f32 0.0, %v455
      %v457 = vpop.f32.mrb[0].mxu0
      %v458 = vadd.f32 0.0, %v457
      %v459 = vpop.f32.mrb[0].mxu0
      %v460 = vpop.f32.mrb[0].mxu0
      %461 = vdwg.mxu0
      %vm462 = vcmask 64512
      %v464 = vsel %vm462, %v195, 0
      %466 = vmatprep.subr.mxu0 %v197
      %467 = vmatpush1.msra.mxu0 %v196
      %468 = vmatprep.subr.mxu0 0.0
      %469 = vmatpush1.msra.mxu0 0.0
      %470 = vmatprep.subr.mxu0 0.0
      %471 = vmatpush1.msra.mxu0 0.0
      %472 = vmatprep.subr.mxu0 0.0
      %473 = vmatpush1.msra.mxu0 0.0
      %474 = vmatprep.subr.mxu0 0.0
      %475 = vmatpush1.msra.mxu0 0.0
      %476 = vmatprep.subr.mxu0 0.0
      %477 = vmatpush1.msra.mxu0 0.0
      %478 = vmatprep.subr.mxu0 0.0
      %479 = vmatpush1.msra.mxu0 0.0
      %480 = vmatprep.subr.mxu0 0.0
      %481 = vmatpush1.msra.mxu0 0.0
      %482 = vmatprep.subr.mxu0 0.0
      %483 = vmatpush1.msra.mxu0 0.0
      %484 = vmatprep.subr.mxu0 0.0
      %485 = vmatpush1.msra.mxu0 0.0
      %486 = vmatprep.subr.mxu0 0.0
      %487 = vmatpush1.msra.mxu0 0.0
      %488 = vmatprep.subr.mxu0 0.0
      %489 = vmatpush1.msra.mxu0 0.0
      %490 = vmatprep.subr.mxu0 0.0
      %491 = vmatpush1.msra.mxu0 0.0
      %492 = vmatprep.subr.mxu0 0.0
      %493 = vmatpush1.msra.mxu0 0.0
      %494 = vmatprep.subr.mxu0 0.0
      %495 = vmatpush1.msra.mxu0 0.0
      %496 = vmatprep.subr.mxu0 0.0
      %497 = vmatpush1.msra.mxu0 0.0
      %498 = vmatprep.subr.mxu0 0.0
      %499 = vmatpush1.msra.mxu0 0.0
      %500 = vmatprep.subr.mxu0 0.0
      %501 = vmatpush1.msra.mxu0 0.0
      %502 = vmatprep.subr.mxu0 0.0
      %503 = vmatpush1.msra.mxu0 0.0
      %504 = vmatprep.subr.mxu0 0.0
      %505 = vmatpush1.msra.mxu0 0.0
      %506 = vmatprep.subr.mxu0 0.0
      %507 = vmatpush1.msra.mxu0 0.0
      %508 = vmatprep.subr.mxu0 0.0
      %509 = vmatpush1.msra.mxu0 0.0
      %510 = vmatprep.subr.mxu0 0.0
      %511 = vmatpush1.msra.mxu0 0.0
      %512 = vmatprep.subr.mxu0 0.0
      %513 = vmatpush1.msra.mxu0 0.0
      %514 = vmatprep.subr.mxu0 0.0
      %515 = vmatpush1.msra.mxu0 0.0
      %516 = vmatprep.subr.mxu0 0.0
      %517 = vmatpush1.msra.mxu0 0.0
      %518 = vmatprep.subr.mxu0 0.0
      %519 = vmatpush1.msra.mxu0 0.0
      %520 = vmatprep.subr.mxu0 0.0
      %521 = vmatpush1.msra.mxu0 0.0
      %522 = vmatprep.subr.mxu0 0.0
      %523 = vmatpush1.msra.mxu0 0.0
      %524 = vmatprep.subr.mxu0 0.0
      %525 = vmatpush1.msra.mxu0 0.0
      %526 = vmatprep.subr.mxu0 0.0
      %527 = vmatpush1.msra.mxu0 0.0
      %528 = vmatprep.subr.mxu0 0.0
      %529 = vmatpush1.msra.mxu0 0.0
      %530 = vmatprep.mubr.f32.mxu0 0.0
      %531 = vmatmul.mubr.f32.gmra.mrb[0].mxu0 %v464
      %v532 = vpop.f32.mrb[0].mxu0
      %v533 = vadd.f32 %v456, %v532
      %v534 = vpop.f32.mrb[0].mxu0
      %v535 = vadd.f32 %v458, %v534
      %536 = vdwg.mxu0
      %v537 = vld [vmem:[%s3] sm:$0xff]
      %v538 = vld [vmem:[%s3 + $0x8] sm:$0xff]
      %v539 = vld [vmem:[%s3 + $0x10] sm:$0xff]
      %v540 = vld [vmem:[%s3 + $0x18] sm:$0xff]
      %v541 = vld [vmem:[%s3 + $0x20] sm:$0xff]
      %v542 = vld [vmem:[%s3 + $0x28] sm:$0xff]
      %v543 = vld [vmem:[%s3 + $0x30] sm:$0xff]
      %v544 = vld [vmem:[%s3 + $0x38] sm:$0xff]
      %v545 = vld [vmem:[%s3 + $0x40] sm:$0xff]
      %v546 = vld [vmem:[%s3 + $0x48] sm:$0xff]
      %v547 = vld [vmem:[%s3 + $0x50] sm:$0xff]
      %v548 = vld [vmem:[%s3 + $0x58] sm:$0xff]
      %v549 = vld [vmem:[%s3 + $0x60] sm:$0xff]
      %v550 = vld [vmem:[%s3 + $0x68] sm:$0xff]
      %v551 = vld [vmem:[%s3 + $0x70] sm:$0xff]
      %v552 = vld [vmem:[%s3 + $0x78] sm:$0xff]
      %v553 = vld [vmem:[%s3 + $0x80] sm:$0xff]
      %v554 = vld [vmem:[%s3 + $0x88] sm:$0xff]
      %v555 = vld [vmem:[%s3 + $0x90] sm:$0xff]
      %v556 = vld [vmem:[%s3 + $0x98] sm:$0xff]
      %v557 = vld [vmem:[%s3 + $0xa0] sm:$0xff]
      %v558 = vld [vmem:[%s3 + $0xa8] sm:$0xff]
      %v559 = vld [vmem:[%s3 + $0xb0] sm:$0xff]
      %v560 = vld [vmem:[%s3 + $0xb8] sm:$0xff]
      %v561 = vld [vmem:[%s3 + $0xc0] sm:$0xff]
      %v562 = vld [vmem:[%s3 + $0xc8] sm:$0xff]
      %v563 = vld [vmem:[%s3 + $0xd0] sm:$0xff]
      %v564 = vld [vmem:[%s3 + $0xd8] sm:$0xff]
      %v565 = vld [vmem:[%s3 + $0xe0] sm:$0xff]
      %v566 = vld [vmem:[%s3 + $0xe8] sm:$0xff]
      %v567 = vld [vmem:[%s3 + $0xf0] sm:$0xff]
      %v568 = vld [vmem:[%s3 + $0xf8] sm:$0xff]
      %v601 = vunpack.c.l.b16 %v537
      %v602 = vunpack.c.h.b16 %v537
      %v603 = vunpack.c.l.b16 %v538
      %v604 = vunpack.c.h.b16 %v538
      %v605 = vunpack.c.l.b16 %v539
      %v606 = vunpack.c.h.b16 %v539
      %v607 = vunpack.c.l.b16 %v540
      %v608 = vunpack.c.h.b16 %v540
      %v609 = vunpack.c.l.b16 %v541
      %v610 = vunpack.c.h.b16 %v541
      %v611 = vunpack.c.l.b16 %v542
      %v612 = vunpack.c.h.b16 %v542
      %v613 = vunpack.c.l.b16 %v543
      %v614 = vunpack.c.h.b16 %v543
      %v615 = vunpack.c.l.b16 %v544
      %v616 = vunpack.c.h.b16 %v544
      %v617 = vunpack.c.l.b16 %v545
      %v618 = vunpack.c.h.b16 %v545
      %v619 = vunpack.c.l.b16 %v546
      %v620 = vunpack.c.h.b16 %v546
      %v621 = vunpack.c.l.b16 %v547
      %v622 = vunpack.c.h.b16 %v547
      %v623 = vunpack.c.l.b16 %v548
      %v624 = vunpack.c.h.b16 %v548
      %v625 = vunpack.c.l.b16 %v549
      %v626 = vunpack.c.h.b16 %v549
      %v627 = vunpack.c.l.b16 %v550
      %v628 = vunpack.c.h.b16 %v550
      %v629 = vunpack.c.l.b16 %v551
      %v630 = vunpack.c.h.b16 %v551
      %v631 = vunpack.c.l.b16 %v552
      %v632 = vunpack.c.h.b16 %v552
      %v633 = vunpack.c.l.b16 %v553
      %v634 = vunpack.c.h.b16 %v553
      %v635 = vunpack.c.l.b16 %v554
      %v636 = vunpack.c.h.b16 %v554
      %v637 = vunpack.c.l.b16 %v555
      %v638 = vunpack.c.h.b16 %v555
      %v639 = vunpack.c.l.b16 %v556
      %v640 = vunpack.c.h.b16 %v556
      %v641 = vunpack.c.l.b16 %v557
      %v642 = vunpack.c.h.b16 %v557
      %v643 = vunpack.c.l.b16 %v558
      %v644 = vunpack.c.h.b16 %v558
      %v645 = vunpack.c.l.b16 %v559
      %v646 = vunpack.c.h.b16 %v559
      %v647 = vunpack.c.l.b16 %v560
      %v648 = vunpack.c.h.b16 %v560
      %v649 = vunpack.c.l.b16 %v561
      %v650 = vunpack.c.h.b16 %v561
      %v651 = vunpack.c.l.b16 %v562
      %v652 = vunpack.c.h.b16 %v562
      %v653 = vunpack.c.l.b16 %v563
      %v654 = vunpack.c.h.b16 %v563
      %v655 = vunpack.c.l.b16 %v564
      %v656 = vunpack.c.h.b16 %v564
      %v657 = vunpack.c.l.b16 %v565
      %v658 = vunpack.c.h.b16 %v565
      %v659 = vunpack.c.l.b16 %v566
      %v660 = vunpack.c.h.b16 %v566
      %v661 = vunpack.c.l.b16 %v567
      %v662 = vunpack.c.h.b16 %v567
      %v663 = vunpack.c.l.b16 %v568
      %v664 = vunpack.c.h.b16 %v568
      %v665 = vpack.c.b16 %v603, %v601
      %v666 = vpack.c.b16 %v604, %v602
      %v667 = vpack.c.b16 %v607, %v605
      %v668 = vpack.c.b16 %v608, %v606
      %v669 = vpack.c.b16 %v611, %v609
      %v670 = vpack.c.b16 %v612, %v610
      %v671 = vpack.c.b16 %v615, %v613
      %v672 = vpack.c.b16 %v616, %v614
      %v673 = vpack.c.b16 %v619, %v617
      %v674 = vpack.c.b16 %v620, %v618
      %v675 = vpack.c.b16 %v623, %v621
      %v676 = vpack.c.b16 %v624, %v622
      %v677 = vpack.c.b16 %v627, %v625
      %v678 = vpack.c.b16 %v628, %v626
      %v679 = vpack.c.b16 %v631, %v629
      %v680 = vpack.c.b16 %v632, %v630
      %v681 = vpack.c.b16 %v635, %v633
      %v682 = vpack.c.b16 %v636, %v634
      %v683 = vpack.c.b16 %v639, %v637
      %v684 = vpack.c.b16 %v640, %v638
      %v685 = vpack.c.b16 %v643, %v641
      %v686 = vpack.c.b16 %v644, %v642
      %v687 = vpack.c.b16 %v647, %v645
      %v688 = vpack.c.b16 %v648, %v646
      %v689 = vpack.c.b16 %v651, %v649
      %v690 = vpack.c.b16 %v652, %v650
      %v691 = vpack.c.b16 %v655, %v653
      %v692 = vpack.c.b16 %v656, %v654
      %v693 = vpack.c.b16 %v659, %v657
      %v694 = vpack.c.b16 %v660, %v658
      %v695 = vpack.c.b16 %v663, %v661
      %v696 = vpack.c.b16 %v664, %v662
      %729 = vmatprep.subr.bf16.mxu0 %v666
      %730 = vmatpush1.bf16.msra.mxu0 %v665
      %731 = vmatprep.subr.bf16.mxu0 %v668
      %732 = vmatpush1.bf16.msra.mxu0 %v667
      %733 = vmatprep.subr.bf16.mxu0 %v670
      %734 = vmatpush1.bf16.msra.mxu0 %v669
      %735 = vmatprep.subr.bf16.mxu0 %v672
      %736 = vmatpush1.bf16.msra.mxu0 %v671
      %737 = vmatprep.subr.bf16.mxu0 %v674
      %738 = vmatpush1.bf16.msra.mxu0 %v673
      %739 = vmatprep.subr.bf16.mxu0 %v676
      %740 = vmatpush1.bf16.msra.mxu0 %v675
      %741 = vmatprep.subr.bf16.mxu0 %v678
      %742 = vmatpush1.bf16.msra.mxu0 %v677
      %743 = vmatprep.subr.bf16.mxu0 %v680
      %744 = vmatpush1.bf16.msra.mxu0 %v679
      %745 = vmatprep.subr.bf16.mxu0 %v682
      %746 = vmatpush1.bf16.msra.mxu0 %v681
      %747 = vmatprep.subr.bf16.mxu0 %v684
      %748 = vmatpush1.bf16.msra.mxu0 %v683
      %749 = vmatprep.subr.bf16.mxu0 %v686
      %750 = vmatpush1.bf16.msra.mxu0 %v685
      %751 = vmatprep.subr.bf16.mxu0 %v688
      %752 = vmatpush1.bf16.msra.mxu0 %v687
      %753 = vmatprep.subr.bf16.mxu0 %v690
      %754 = vmatpush1.bf16.msra.mxu0 %v689
      %755 = vmatprep.subr.bf16.mxu0 %v692
      %756 = vmatpush1.bf16.msra.mxu0 %v691
      %757 = vmatprep.subr.bf16.mxu0 %v694
      %758 = vmatpush1.bf16.msra.mxu0 %v693
      %759 = vmatprep.subr.bf16.mxu0 %v696
      %760 = vmatpush1.bf16.msra.mxu0 %v695
      %761 = vmatprep.mubr.bf16.mxu0 %v228
      %762 = vmatmul.mubr.bf16.gmra.mrb[0].mxu0 %v227
      %v763 = vpop.f32.mrb[0].mxu0
      %v764 = vadd.f32 0.0, %v763
      %v765 = vpop.f32.mrb[0].mxu0
      %v766 = vadd.f32 0.0, %v765
      %v767 = vpop.f32.mrb[0].mxu0
      %v768 = vpop.f32.mrb[0].mxu0
      %769 = vdwg.mxu0
      %v770 = vadd.f32 %v533, %v764
      %v771 = vadd.f32 %v535, %v766
      %772 = vst [vmem:[%s194] sm:$0xff] %v770
      %773 = vst [vmem:[%s194 + $0x8] sm:$0xff] %v771
      %p774 = scmp.lt.s32.totalorder %s15, 1
      %s775 = scalar_select %p774, %s15, 1
      %s776 = smul.addr %s775, 2
      %s777 = smul.addr %s776, 8
      %s778 = scalar_lea.vmem %s4, %s777
      // Predicated region
      $region37: #{_forward.1} parent=35 // pred_check
        %p779 = pneg %p122
      $region38: #{_forward.1} parent=35 // pred_check_branch
        %781 = sbr.rel (%p779) target = $region40
      $region39: #{_forward.1} parent=35 // pred_region
        _
      $region40: #{_forward.1} parent=35 // pred_fallthru
        _
    $region36: #{_forward.1} parent=5 // pred_fallthru
      _
    %p782 = scmp.le.s32.totalorder 2, %s10
    // Predicated region
    $region41: #{_forward.1} parent=5 // pred_check
      %p783 = pneg %p782
    $region42: #{_forward.1} parent=5 // pred_check_branch
      %785 = sbr.rel (%p783) target = $region44
    $region43: #{_forward.1} parent=5 // pred_region
      %s786 = ssub.s32 %s10, 2
      // Predicated region
      $region45: #{_forward.1} parent=43 // pred_check
        %p787 = pneg %p128
      $region46: #{_forward.1} parent=43 // pred_check_branch
        %789 = sbr.rel (%p787) target = $region48
      $region47: #{_forward.1} parent=43 // pred_region
        %p790 = scmp.lt.s32.totalorder %s16, 1
        %s791 = scalar_select %p790, %s16, 1
        %s792 = smul.addr %s791, 2
        %s793 = smul.addr %s792, 8
        %s794 = scalar_lea.vmem %s4, %s793
      $region48: #{_forward.1} parent=43 // pred_fallthru
        _
    $region44: #{_forward.1} parent=5 // pred_fallthru
      _
  $region6: #{_forward.1} parent=0 // loop_footer
    %s14 = sadd.s32 1, %s10
  $region7: #{_forward.1} parent=0 // loop_footer_branch
    %9 = sbr.rel target = $region3
  $region8: #{_forward.1} parent=0 // loop_exit
    _

</llo_original>
